<compile_context>
chip_gen: v6e
topology: v6e:2x2x1
jax: 0.10.0
libtpu: 0.0.40
codegen_flags: <defaults>
</compile_context>

<pallas_src>
import math

import jax
import jax.numpy as jnp
from jax.experimental import pallas as pl
from jax.experimental.pallas import tpu as pltpu


# -----------------------------------------------------------------------------
# Kernels
# -----------------------------------------------------------------------------
def _transform_kernel_f32(eps_m1_ref, diag_ref, a_ref, x_ref, o_ref):
    """Tiled kernel, f32 output: accumulate directly into the resident o_ref tile.

    Grid = (N//tm, D//tn, N//tk), reduction axis (k) last. Requires tm == tk so
    the diagonal of a row block lives entirely in the k == i adj tile and the
    local rows of the adj tile and the x tile line up.
    """
    i = pl.program_id(0)
    k = pl.program_id(2)

    @pl.when(k == 0)
    def _():
        o_ref[...] = jnp.zeros_like(o_ref)

    # Hot path: a single raw MXU matmul per step.
    o_ref[...] += jnp.dot(a_ref[...], x_ref[...],
                          preferred_element_type=jnp.float32)

    # Diagonal correction, off the hot path: pure VPU multiply-add using the
    # precomputed diag(adj) slice (no iota / mask / cross-lane reduce).
    @pl.when(i == k)
    def _():
        o_ref[...] += (eps_m1_ref[0] * diag_ref[...]
                       * x_ref[...].astype(jnp.float32))


def _transform_kernel_acc(eps_m1_ref, diag_ref, a_ref, x_ref, o_ref, acc_ref):
    """Tiled kernel for narrow output dtypes: f32 VMEM scratch accumulator."""
    i = pl.program_id(0)
    k = pl.program_id(2)

    @pl.when(k == 0)
    def _():
        acc_ref[...] = jnp.zeros_like(acc_ref)

    acc_ref[...] += jnp.dot(a_ref[...], x_ref[...],
                            preferred_element_type=jnp.float32)

    @pl.when(i == k)
    def _():
        acc_ref[...] += (eps_m1_ref[0] * diag_ref[...]
                         * x_ref[...].astype(jnp.float32))

    @pl.when(k == pl.num_programs(2) - 1)
    def _():
        o_ref[...] = acc_ref[...].astype(o_ref.dtype)


# -----------------------------------------------------------------------------
# Tile selection
# -----------------------------------------------------------------------------
_VMEM_BUDGET = 40 * 1024 * 1024   # working-set budget; safe under v7x's 64 MiB VMEM
_VMEM_LIMIT = 48 * 1024 * 1024    # explicit limit: above 16/32 MiB scoped defaults


def _vmem_estimate(tm, tk, tn, adj_bytes, x_bytes, out_bytes, use_scratch):
    b = 2 * tm * tk * adj_bytes        # adj tile, double-buffered
    b += 2 * tk * tn * x_bytes         # x tile, double-buffered
    b += 2 * tm * 128 * 4              # diag tile (lane-padded), double-buffered
    b += 2 * tm * tn * out_bytes       # output tile
    if use_scratch:
        b += tm * tn * 4               # f32 accumulator scratch
    return b


def _select_tiles(N, D, adj_bytes, x_bytes, out_bytes, use_scratch, budget):
    tm_cands = [t for t in (1024, 512, 256, 128) if N % t == 0] or [N]
    tn_cands = [D] + [t for t in (2048, 1024, 512, 256, 128) if t < D and D % t == 0]
    # tn = D first (adj -- the N*N operand -- streamed exactly once), then the
    # largest row/reduction tile that fits the VMEM budget (fewer x re-reads).
    for tn in tn_cands:
        for tm in tm_cands:
            if _vmem_estimate(tm, tm, tn, adj_bytes, x_bytes, out_bytes,
                              use_scratch) <= budget:
                # v7x has 2 TensorCores: avoid a single row block leaving one idle.
                if (N // tm == 1 and tm % 2 == 0 and (tm // 2) % 128 == 0
                        and N % (tm // 2) == 0):
                    tm = tm // 2
                return tm, tn
    return None


# -----------------------------------------------------------------------------
# Wrapper
# -----------------------------------------------------------------------------
def transform(adj, x, eps, *, compute_dtype=None,
              vmem_budget_bytes=_VMEM_BUDGET, vmem_limit_bytes=_VMEM_LIMIT):
    """Pallas TPU forward of `Transform`: (diagonal-rescaled adj) @ x.

    compute_dtype=jnp.bfloat16 narrows the streamed operands (the kernel is
    HBM-bandwidth bound on adj), keeping f32 accumulation and f32 output; results
    then deviate slightly from the f32 PyTorch reference unless adj is exactly
    representable (e.g. a 0/1 adjacency).
    """
    adj = jnp.asarray(adj)
    x = jnp.asarray(x)
    N, K = adj.shape
    K2, D = x.shape
    if not (N == K == K2):
        raise ValueError("adj must be square and match x's rows")

    out_dtype = x.dtype
    if compute_dtype is not None:
        adj = adj.astype(compute_dtype)
        x = x.astype(compute_dtype)
    # TODO(synk): int8 (v5e/v6e) / fp8 (v7x) adj path for exactly-representable
    # binary adjacencies would cut adj HBM traffic a further 2x over bf16.

    # Precompute diag(adj) in the wrapper (trivially cheap in XLA) so the in-kernel
    # correction is a pure multiply-add. Taken from the (possibly narrowed) adj so
    # the identity matches the streamed operand exactly.
    diag = jnp.diagonal(adj).astype(jnp.float32).reshape(N, 1)
    eps_m1 = jnp.asarray(eps, dtype=jnp.float32).reshape(-1)[:1] - 1.0  # (eps - 1)

    adj_bytes = adj.dtype.itemsize
    x_bytes = x.dtype.itemsize
    out_bytes = jnp.dtype(out_dtype).itemsize
    use_scratch = out_dtype != jnp.float32

    tiles = _select_tiles(N, D, adj_bytes, x_bytes, out_bytes, use_scratch,
                          vmem_budget_bytes)
    if tiles is None:
        raise ValueError("no tile configuration fits the VMEM budget")
    tm, tn = tiles
    tk = tm                                   # tm == tk: diagonal tile is i == k
    if N % tm != 0 or D % tn != 0:
        # TODO(synk): pad ragged N / D up to a tile multiple instead of raising.
        raise ValueError("N must divide by the row tile and D by the column tile")

    grid = (N // tm, D // tn, N // tk)

    # Honest traffic estimate: adj streamed D/tn times, x streamed N/tm times.
    bytes_accessed = (N * N * adj_bytes * (D // tn)
                      + N * D * x_bytes * (N // tm)
                      + N * 4
                      + N * D * out_bytes)
    cost = pl.CostEstimate(flops=2 * N * N * D + 3 * N * D,
                           transcendentals=0,
                           bytes_accessed=int(bytes_accessed))

    kernel = _transform_kernel_acc if use_scratch else _transform_kernel_f32
    scratch_shapes = ([pltpu.VMEM((tm, tn), jnp.float32)] if use_scratch else [])

    return pl.pallas_call(
        kernel,
        out_shape=jax.ShapeDtypeStruct((N, D), out_dtype),
        grid_spec=pltpu.PrefetchScalarGridSpec(
            num_scalar_prefetch=0,
            grid=grid,
            in_specs=[
                pl.BlockSpec(memory_space=pltpu.MemorySpace.SMEM),   # eps - 1 scalar
                pl.BlockSpec((tm, 1), lambda i, j, k: (i, 0)),       # diag(adj) slice
                pl.BlockSpec((tm, tk), lambda i, j, k: (i, k)),      # adj tile
                pl.BlockSpec((tk, tn), lambda i, j, k: (k, j)),      # x tile
            ],
            out_specs=pl.BlockSpec((tm, tn), lambda i, j, k: (i, j)),
            scratch_shapes=scratch_shapes,
        ),
        compiler_params=pltpu.CompilerParams(
            dimension_semantics=("parallel", "parallel", "arbitrary"),
            vmem_limit_bytes=vmem_limit_bytes,
        ),
        cost_estimate=cost,
    )(eps_m1, diag, adj, x)


def transform_ref(adj, x, eps):
    """Pure-JAX reference mirroring the PyTorch forward exactly."""
    v = eps * jnp.diag(adj)
    mask = jnp.diag(jnp.ones_like(v))
    adj2 = mask * jnp.diag(v) + (1.0 - mask) * adj
    return adj2 @ x


def _check(out, ref, rel, name):
    err = float(jnp.max(jnp.abs(out - ref)))
    scale = float(jnp.max(jnp.abs(ref)))
    assert err <= rel * scale + 1e-6, f"{name}: max err {err} vs scale {scale}"


if __name__ == "__main__":
    # Deterministic parameter init, matching nn.init.constant_(eps, 0.21/sqrt(1))
    eps_val = 0.21 / math.sqrt(1)
    eps = jnp.array([eps_val], dtype=jnp.float32)

    key = jax.random.PRNGKey(0)
    k1, k2, k3, k4 = jax.random.split(key, 4)

    # --- Test 1: shipped-size shape (N=256, D=128), f32 ---
    N, D = 256, 128
    adj = jax.random.normal(k1, (N, N), dtype=jnp.float32)
    x = jax.random.normal(k2, (N, D), dtype=jnp.float32)
    out = jax.block_until_ready(transform(adj, x, eps))
    assert out.shape == (N, D)
    _check(out, transform_ref(adj, x, eps), 2e-3, "f32 small")

    # --- Test 2: multi-block grid (N=512, D=256), f32 ---
    N2, D2 = 512, 256
    adj2 = jax.random.normal(k3, (N2, N2), dtype=jnp.float32)
    x2 = jax.random.normal(k4, (N2, D2), dtype=jnp.float32)
    out2 = jax.block_until_ready(transform(adj2, x2, eps))
    assert out2.shape == (N2, D2)
    _check(out2, transform_ref(adj2, x2, eps), 2e-3, "f32 tiled")

    # --- Test 3: bf16 streamed operands (halves adj HBM bytes), f32 accumulation ---
    out3 = jax.block_until_ready(
        transform(adj2, x2, eps, compute_dtype=jnp.bfloat16))
    adj2_bf = adj2.astype(jnp.bfloat16).astype(jnp.float32)
    x2_bf = x2.astype(jnp.bfloat16).astype(jnp.float32)
    _check(out3, transform_ref(adj2_bf, x2_bf, eps), 2e-2, "bf16")

    print("KERNEL_OK")
</pallas_src>

<mosaic_0001>
module attributes {stable_mosaic.version = 11 : i64} {
  func.func @_transform_kernel_f32(%arg0: i32, %arg1: i32, %arg2: i32, %arg3: memref<1xf32, #tpu.memory_space<smem>>, %arg4: memref<128x1xf32, #tpu.memory_space<vmem>>, %arg5: memref<128x128xf32, #tpu.memory_space<vmem>>, %arg6: memref<128x128xf32, #tpu.memory_space<vmem>>, %arg7: memref<128x128xf32, #tpu.memory_space<vmem>>) attributes {dimension_semantics = [#tpu.dimension_semantics<parallel>, #tpu.dimension_semantics<parallel>, #tpu.dimension_semantics<arbitrary>], iteration_bounds = array<i64: 2, 1, 2>, scalar_prefetch = 0 : i64, scratch_operands = 0 : i64, tpu.core_type = #tpu.core_type<tc>, window_params = [{transform_indices = @transform_0, window_bounds = array<i64: 1>}, {transform_indices = @transform_1, window_bounds = array<i64: 128, 1>}, {transform_indices = @transform_2, window_bounds = array<i64: 128, 128>}, {transform_indices = @transform_3, window_bounds = array<i64: 128, 128>}, {transform_indices = @transform_4, window_bounds = array<i64: 128, 128>}]} {
    %c0_i32 = arith.constant 0 : i32
    %0 = arith.cmpi eq, %arg2, %c0_i32 : i32
    %1 = arith.extui %0 : i1 to i32
    %c0_i32_0 = arith.constant 0 : i32
    %2 = arith.cmpi ne, %1, %c0_i32_0 : i32
    scf.if %2 {
      %cst_9 = arith.constant 0.000000e+00 : f32
      %12 = vector.broadcast %cst_9 : f32 to vector<128x128xf32>
      %c0_10 = arith.constant 0 : index
      %c0_11 = arith.constant 0 : index
      %13 = vector.load %arg7[%c0_10, %c0_11] : memref<128x128xf32, #tpu.memory_space<vmem>>, vector<128x128xf32>
      tpu.vector_store %arg7[%c0_10, %c0_11], %12 {strides = array<i32>} : memref<128x128xf32, #tpu.memory_space<vmem>>, vector<128x128xf32>,
    } else {
    }
    %c0 = arith.constant 0 : index
    %c0_1 = arith.constant 0 : index
    %3 = vector.load %arg7[%c0, %c0_1] : memref<128x128xf32, #tpu.memory_space<vmem>>, vector<128x128xf32>
    %c0_2 = arith.constant 0 : index
    %c0_3 = arith.constant 0 : index
    %4 = vector.load %arg5[%c0_2, %c0_3] : memref<128x128xf32, #tpu.memory_space<vmem>>, vector<128x128xf32>
    %c0_4 = arith.constant 0 : index
    %c0_5 = arith.constant 0 : index
    %5 = vector.load %arg6[%c0_4, %c0_5] : memref<128x128xf32, #tpu.memory_space<vmem>>, vector<128x128xf32>
    %cst = arith.constant dense<0.000000e+00> : vector<128x128xf32>
    %6 = tpu.matmul %4, %5, %cst {dimension_numbers = #tpu.dot_dimension_numbers<[1], [0], [0], [1], [0, 0, 1, 1], [], []>} : vector<128x128xf32>, vector<128x128xf32>, vector<128x128xf32> -> vector<128x128xf32>
    %7 = arith.addf %3, %6 : vector<128x128xf32>
    %c0_6 = arith.constant 0 : index
    %c0_7 = arith.constant 0 : index
    %8 = vector.load %arg7[%c0_6, %c0_7] : memref<128x128xf32, #tpu.memory_space<vmem>>, vector<128x128xf32>
    tpu.vector_store %arg7[%c0_6, %c0_7], %7 {strides = array<i32>} : memref<128x128xf32, #tpu.memory_space<vmem>>, vector<128x128xf32>,
    %9 = arith.cmpi eq, %arg0, %arg2 : i32
    %10 = arith.extui %9 : i1 to i32
    %c0_i32_8 = arith.constant 0 : i32
    %11 = arith.cmpi ne, %10, %c0_i32_8 : i32
    scf.if %11 {
      %c0_9 = arith.constant 0 : index
      %c0_10 = arith.constant 0 : index
      %12 = vector.load %arg7[%c0_9, %c0_10] : memref<128x128xf32, #tpu.memory_space<vmem>>, vector<128x128xf32>
      %c0_11 = arith.constant 0 : index
      %13 = memref.load %arg3[%c0_11] : memref<1xf32, #tpu.memory_space<smem>>
      %c0_12 = arith.constant 0 : index
      %c0_13 = arith.constant 0 : index
      %14 = vector.load %arg4[%c0_12, %c0_13] : memref<128x1xf32, #tpu.memory_space<vmem>>, vector<128x1xf32>
      %15 = vector.broadcast %13 : f32 to vector<128x1xf32>
      %16 = arith.mulf %15, %14 : vector<128x1xf32>
      %c0_14 = arith.constant 0 : index
      %c0_15 = arith.constant 0 : index
      %17 = vector.load %arg6[%c0_14, %c0_15] : memref<128x128xf32, #tpu.memory_space<vmem>>, vector<128x128xf32>
      %18 = vector.broadcast %16 : vector<128x1xf32> to vector<128x128xf32>
      %19 = arith.mulf %18, %17 : vector<128x128xf32>
      %20 = arith.addf %12, %19 : vector<128x128xf32>
      %c0_16 = arith.constant 0 : index
      %c0_17 = arith.constant 0 : index
      %21 = vector.load %arg7[%c0_16, %c0_17] : memref<128x128xf32, #tpu.memory_space<vmem>>, vector<128x128xf32>
      tpu.vector_store %arg7[%c0_16, %c0_17], %20 {strides = array<i32>} : memref<128x128xf32, #tpu.memory_space<vmem>>, vector<128x128xf32>,
    } else {
    }
    return
  }
  func.func @transform_0(%arg0: i32, %arg1: i32, %arg2: i32) -> i32 {
    %c0_i32 = arith.constant 0 : i32
    %c0_i32_0 = arith.constant 0 : i32
    return %c0_i32 : i32
  }
  func.func @transform_1(%arg0: i32, %arg1: i32, %arg2: i32) -> (i32, i32) {
    %c0_i32 = arith.constant 0 : i32
    %c0_i32_0 = arith.constant 0 : i32
    return %arg0, %c0_i32 : i32, i32
  }
  func.func @transform_2(%arg0: i32, %arg1: i32, %arg2: i32) -> (i32, i32) {
    %c0_i32 = arith.constant 0 : i32
    return %arg0, %arg2 : i32, i32
  }
  func.func @transform_3(%arg0: i32, %arg1: i32, %arg2: i32) -> (i32, i32) {
    %c0_i32 = arith.constant 0 : i32
    return %arg2, %arg1 : i32, i32
  }
  func.func @transform_4(%arg0: i32, %arg1: i32, %arg2: i32) -> (i32, i32) {
    %c0_i32 = arith.constant 0 : i32
    return %arg0, %arg1 : i32, i32
  }
}

</mosaic_0001>

<llo_original>
// kernel: tpu_custom_call.1
$region0: #{tpu_custom_call.1}
  #allocation0 [shape = 'u32[]', space=smem, size = 0x4, offset = 0x4, fixed_abs, tag = 'smem constant byte address 0x4 - core index']
  #allocation1 [shape = 'u32[144,128]{1,0:T(1,128)}', space=vmem, size = 0x12000, scoped, tag = 'internal scratch']
  #allocation2 [shape = 'f32[1]{0:T(128)S(6)}', space=smem, size = 0x200, scoped, tag = 'scoped memory for tpu_custom_call.1']
  %s0 = inlined_call_operand.<no memory space> [shape: f32[1], index: 0, kind: input, shape index: {}]
  %s1 = inlined_call_operand.vmem [shape: f32[256,1], index: 1, kind: input, shape index: {}]
  %s2 = inlined_call_operand.hbm [shape: f32[256,256], index: 2, kind: input, shape index: {}]
  %s3 = inlined_call_operand.vmem [shape: f32[256,128], index: 3, kind: input, shape index: {}]
  %s4 = inlined_call_operand.hbm [shape: f32[256,128], index: 4, kind: output, shape index: {}]
  %s5 = sld [smem:[#allocation0]]
  $region61: #{tpu_custom_call.1} parent=0
    _
  %s7 = ssub.s32 1, %s5
  %s8 = scalar_select 0, %s7, %s5
  %9 = sst [smem:[#allocation2]] %s0
  $region1: #{tpu_custom_call.1} parent=0
    #allocation3 [shape = 'u8[131072]{0}', space=vmem, size = 0x20000, scoped, tag = 'input window, operand 2']
    #allocation4 [shape = 's32[2]{0}', space=sflag, size = 0x8, scoped, tag = 'scoped memory for tpu_custom_call.1']
    #allocation5 [shape = 's32[2]{0}', space=sflag, size = 0x8, scoped, tag = 'scoped memory for tpu_custom_call.1']
    #allocation6 [shape = 'u8[131072]{0}', space=vmem, size = 0x20000, scoped, tag = 'output window, operand 0']
    %10 = vsyncpa [#allocation4], 0
    %s11 = scalar_lea.sflag [#allocation4], 1
    %12 = vsyncpa %s11, 0
    %13 = vsyncpa [#allocation5], 0
    %s14 = scalar_lea.sflag [#allocation5], 1
    %15 = vsyncpa %s14, 0
    loop: start=0, step=1, limit=6
    $region2: #{tpu_custom_call.1} parent=1 // loop_pre_header
      _
    $region3: #{tpu_custom_call.1} parent=1 // loop_header
      %s17 = sphi 0, %s21
      %p18 = scmp.ge.s32.totalorder %s17, 6
      %s24 = sphi 0, %s43
      %s25 = sphi 0, %s39
      %s26 = sphi 0, %s35
      %s27 = sphi 0, %s24
      %s28 = sphi 0, %s25
      %s29 = sphi 0, %s26
      %s30 = sphi 0, %s27
      %s31 = sphi 0, %s28
      %s32 = sphi 0, %s29
      %s44 = sphi 0, %s44
      %s46 = sphi 0, %s44
      %s47 = sphi 0, %s46
      %s61 = sphi 0, %s47
      %s67 = sphi 0, %s69
      %s70 = sphi 0, %s67
      %s71 = sphi 0, %s70
      %s87 = sphi 0, %s71
      %s95 = sphi 0, %s97
      %s98 = sphi 0, %s95
      %s99 = sphi 0, %s98
      %s115 = sphi 0, %s99
      %s123 = sphi 0, %s125
      %s126 = sphi 0, %s123
      %s127 = sphi 0, %s126
      %s143 = sphi 0, %s127
      %s151 = sphi 0, %s153
      %s154 = sphi 0, %s151
      %s155 = sphi 0, %s154
      %s171 = sphi 0, %s155
    $region4: #{tpu_custom_call.1} parent=1 // loop_header_branch
      %20 = sbr.rel (%p18) target = $region8
    $region5: #{tpu_custom_call.1} parent=1 // loop_body
      %s22 = ssub.s32 %s17, 1
      %s23 = ssub.s32 %s17, 2
      %s33 = sadd.s32 1, %s26
      %p34 = scmp.ge.s32.totalorder %s33, 2
      %s35 = scalar_select %p34, 0, %s33
      %s36 = sadd.s32 1, %s25
      %s37 = scalar_select %p34, %s36, %s25
      %p38 = scmp.ge.s32.totalorder %s37, 1
      %s39 = scalar_select %p38, 0, %s37
      %s40 = sadd.s32 1, %s24
      %s41 = scalar_select %p38, %s40, %s24
      %p42 = scmp.ge.s32.totalorder %s41, 2
      %s43 = scalar_select %p42, 0, %s41
      %s45 = sadd.s32 %s44, 1
      %p48 = scmp.eq.s32.totalorder %s17, 3
      %p49 = scmp.ne.s32.totalorder %s44, %s46
      %p50 = scmp.eq.s32.totalorder %s17, 0
      %p51 = por %p49, %p50
      %p52 = scmp.ne.s32.totalorder %s44, %s46
      %p53 = scmp.eq.s32.totalorder %s22, 3
      %p54 = por %p52, %p53
      %p55 = scmp.ne.s32.totalorder %s46, %s47
      %p56 = scmp.eq.s32.totalorder %s22, 0
      %p57 = por %p55, %p56
      %p58 = scmp.ne.s32.totalorder %s46, %s47
      %p59 = scmp.eq.s32.totalorder %s23, 3
      %p60 = por %p58, %p59
      %p62 = scmp.ne.s32.totalorder %s47, %s61
      %p63 = scmp.eq.s32.totalorder %s23, 0
      %p64 = por %p62, %p63
      %s65 = ssub.s32 %s24, %s43
      %p66 = scmp.eq.s32.totalorder %s65, 0
      %s68 = sadd.s32 %s67, 1
      %s69 = scalar_select %p66, %s67, %s68
      %p72 = pneg %p66
      %p73 = scmp.eq.s32.totalorder %s17, 3
      %p74 = por %p72, %p73
      %p75 = scmp.ne.s32.totalorder %s67, %s70
      %p76 = scmp.eq.s32.totalorder %s17, 0
      %p77 = por %p75, %p76
      %p78 = scmp.ne.s32.totalorder %s67, %s70
      %p79 = scmp.eq.s32.totalorder %s22, 3
      %p80 = por %p78, %p79
      %p81 = scmp.ne.s32.totalorder %s70, %s71
      %p82 = scmp.eq.s32.totalorder %s22, 0
      %p83 = por %p81, %p82
      %p84 = scmp.ne.s32.totalorder %s70, %s71
      %p85 = scmp.eq.s32.totalorder %s23, 3
      %p86 = por %p84, %p85
      %p88 = scmp.ne.s32.totalorder %s71, %s87
      %p89 = scmp.eq.s32.totalorder %s23, 0
      %p90 = por %p88, %p89
      %s91 = ssub.s32 %s24, %s43
      %s92 = ssub.s32 %s26, %s35
      %s93 = sor.u32 %s91, %s92
      %p94 = scmp.eq.s32.totalorder %s93, 0
      %s96 = sadd.s32 %s95, 1
      %s97 = scalar_select %p94, %s95, %s96
      %p100 = pneg %p94
      %p101 = scmp.eq.s32.totalorder %s17, 3
      %p102 = por %p100, %p101
      %p103 = scmp.ne.s32.totalorder %s95, %s98
      %p104 = scmp.eq.s32.totalorder %s17, 0
      %p105 = por %p103, %p104
      %p106 = scmp.ne.s32.totalorder %s95, %s98
      %p107 = scmp.eq.s32.totalorder %s22, 3
      %p108 = por %p106, %p107
      %p109 = scmp.ne.s32.totalorder %s98, %s99
      %p110 = scmp.eq.s32.totalorder %s22, 0
      %p111 = por %p109, %p110
      %p112 = scmp.ne.s32.totalorder %s98, %s99
      %p113 = scmp.eq.s32.totalorder %s23, 3
      %p114 = por %p112, %p113
      %p116 = scmp.ne.s32.totalorder %s99, %s115
      %p117 = scmp.eq.s32.totalorder %s23, 0
      %p118 = por %p116, %p117
      %s119 = ssub.s32 %s26, %s35
      %s120 = ssub.s32 %s25, %s39
      %s121 = sor.u32 %s119, %s120
      %p122 = scmp.eq.s32.totalorder %s121, 0
      %s124 = sadd.s32 %s123, 1
      %s125 = scalar_select %p122, %s123, %s124
      %p128 = pneg %p122
      %p129 = scmp.eq.s32.totalorder %s17, 3
      %p130 = por %p128, %p129
      %p131 = scmp.ne.s32.totalorder %s123, %s126
      %p132 = scmp.eq.s32.totalorder %s17, 0
      %p133 = por %p131, %p132
      %p134 = scmp.ne.s32.totalorder %s123, %s126
      %p135 = scmp.eq.s32.totalorder %s22, 3
      %p136 = por %p134, %p135
      %p137 = scmp.ne.s32.totalorder %s126, %s127
      %p138 = scmp.eq.s32.totalorder %s22, 0
      %p139 = por %p137, %p138
      %p140 = scmp.ne.s32.totalorder %s126, %s127
      %p141 = scmp.eq.s32.totalorder %s23, 3
      %p142 = por %p140, %p141
      %p144 = scmp.ne.s32.totalorder %s127, %s143
      %p145 = scmp.eq.s32.totalorder %s23, 0
      %p146 = por %p144, %p145
      %s147 = ssub.s32 %s24, %s43
      %s148 = ssub.s32 %s25, %s39
      %s149 = sor.u32 %s147, %s148
      %p150 = scmp.eq.s32.totalorder %s149, 0
      %s152 = sadd.s32 %s151, 1
      %s153 = scalar_select %p150, %s151, %s152
      %p156 = pneg %p150
      %p157 = scmp.eq.s32.totalorder %s17, 3
      %p158 = por %p156, %p157
      %p159 = scmp.ne.s32.totalorder %s151, %s154
      %p160 = scmp.eq.s32.totalorder %s17, 0
      %p161 = por %p159, %p160
      %p162 = scmp.ne.s32.totalorder %s151, %s154
      %p163 = scmp.eq.s32.totalorder %s22, 3
      %p164 = por %p162, %p163
      %p165 = scmp.ne.s32.totalorder %s154, %s155
      %p166 = scmp.eq.s32.totalorder %s22, 0
      %p167 = por %p165, %p166
      %p168 = scmp.ne.s32.totalorder %s154, %s155
      %p169 = scmp.eq.s32.totalorder %s23, 3
      %p170 = por %p168, %p169
      %p172 = scmp.ne.s32.totalorder %s155, %s171
      %p173 = scmp.eq.s32.totalorder %s23, 0
      %p174 = por %p172, %p173
      %p175 = scmp.le.s32.totalorder 1, %s17
      %p176 = scmp.lt.s32.totalorder %s17, 5
      %p177 = pnand %p175, %p176
      %p178 = pneg %p177
      // Predicated region
      $region9: #{tpu_custom_call.1} parent=5 // pred_check
        _
      $region10: #{tpu_custom_call.1} parent=5 // pred_check_branch
        %180 = sbr.rel (%p177) target = $region12
      $region11: #{tpu_custom_call.1} parent=5 // pred_region
        %s181 = ssub.s32 %s17, 1
        // Predicated region
        $region13: #{tpu_custom_call.1} parent=11 // pred_check
          %p182 = pneg %p57
        $region14: #{tpu_custom_call.1} parent=11 // pred_check_branch
          %184 = sbr.rel (%p182) target = $region16
        $region15: #{tpu_custom_call.1} parent=11 // pred_region
          _
        $region16: #{tpu_custom_call.1} parent=11 // pred_fallthru
          _
      $region12: #{tpu_custom_call.1} parent=5 // pred_fallthru
        _
      %p185 = scmp.lt.s32.totalorder %s17, 4
      // Predicated region
      $region17: #{tpu_custom_call.1} parent=5 // pred_check
        %p186 = pneg %p185
      $region18: #{tpu_custom_call.1} parent=5 // pred_check_branch
        %188 = sbr.rel (%p186) target = $region20
      $region19: #{tpu_custom_call.1} parent=5 // pred_region
        // Predicated region
        $region21: #{tpu_custom_call.1} parent=19 // pred_check
          %p189 = pneg %p77
        $region22: #{tpu_custom_call.1} parent=19 // pred_check_branch
          %191 = sbr.rel (%p189) target = $region24
        $region23: #{tpu_custom_call.1} parent=19 // pred_region
          %s192 = smul.u32 16, %s24
          %p193 = scmp.lt.s32.totalorder %s192, 31
          %s194 = scalar_select %p193, %s192, 31
          %s195 = smul.addr %s194, 8
          %s196 = scalar_lea.vmem %s1, %s195
          %s197 = smul.u32 16, %s24
        $region24: #{tpu_custom_call.1} parent=19 // pred_fallthru
          _
        // Predicated region
        $region25: #{tpu_custom_call.1} parent=19 // pred_check
          %p198 = pneg %p105
        $region26: #{tpu_custom_call.1} parent=19 // pred_check_branch
          %200 = sbr.rel (%p198) target = $region28
        $region27: #{tpu_custom_call.1} parent=19 // pred_region
          %s201 = sand.u32 %s95, 1
          %s202 = scalar_lea.sflag [#allocation4], %s201
          %s203 = sand.u32 %s95, 1
          %s204 = smul.addr %s203, 128
          %s205 = scalar_lea.vmem [#allocation3], %s204
          %s206 = smul.u32 16, %s24
          %s208 = ssub.s32 2048, 2048
          %209 = vsyncadd %s202, %s208
          %s210 = smul.addr %s206, 2
          %s211 = sadd.s32 %s26, %s210
          %s212 = smul.addr %s211, 128
          %s213 = scalar_lea.hbm %s2, %s212
          %s214 = sshll.u32 %s205, 4
          %s215 = int_to_ptr.vmem [resolvable:$true] %s214
          %220 = dma.hbm_to_vmem [thread:$0]  %s213, 2048, %s215, %s202, 256, 128, 8
        $region28: #{tpu_custom_call.1} parent=19 // pred_fallthru
          _
        // Predicated region
        $region29: #{tpu_custom_call.1} parent=19 // pred_check
          %p221 = pneg %p133
        $region30: #{tpu_custom_call.1} parent=19 // pred_check_branch
          %223 = sbr.rel (%p221) target = $region32
        $region31: #{tpu_custom_call.1} parent=19 // pred_region
          %s224 = smul.u32 16, %s26
          %p225 = scmp.lt.s32.totalorder %s224, 31
          %s226 = scalar_select %p225, %s224, 31
          %p227 = scmp.lt.s32.totalorder %s25, 0
          %s228 = scalar_select %p227, %s25, 0
          %s229 = sadd.s32 %s228, %s226
          %s230 = smul.addr %s229, 8
          %s231 = scalar_lea.vmem %s3, %s230
          %s232 = smul.u32 16, %s26
        $region32: #{tpu_custom_call.1} parent=19 // pred_fallthru
          _
      $region20: #{tpu_custom_call.1} parent=5 // pred_fallthru
        _
      %p233 = scmp.le.s32.totalorder 1, %s17
      %p234 = scmp.lt.s32.totalorder %s17, 5
      %p235 = pnand %p233, %p234
      %p236 = pneg %p235
      // Predicated region
      $region33: #{tpu_custom_call.1} parent=5 // pred_check
        _
      $region34: #{tpu_custom_call.1} parent=5 // pred_check_branch
        %238 = sbr.rel (%p235) target = $region36
      $region35: #{tpu_custom_call.1} parent=5 // pred_region
        %s239 = ssub.s32 %s17, 1
        %s240 = sand.u32 %s98, 1
        %s241 = scalar_lea.sflag [#allocation4], %s240
        %s242 = sand.u32 %s98, 1
        %s243 = smul.addr %s242, 128
        %s244 = scalar_lea.vmem [#allocation3], %s243
        // Predicated region
        $region37: #{tpu_custom_call.1} parent=35 // pred_check
          %p245 = pneg %p111
        $region38: #{tpu_custom_call.1} parent=35 // pred_check_branch
          %247 = sbr.rel (%p245) target = $region40
        $region39: #{tpu_custom_call.1} parent=35 // pred_region
          %248 = dma.done %s241, 2048
        $region40: #{tpu_custom_call.1} parent=35 // pred_fallthru
          _
        %p249 = pneg %p57
        %p250 = pneg %p54
        %s251 = smul.u32 16, %s27
        %p252 = scmp.lt.s32.totalorder %s251, 31
        %s253 = scalar_select %p252, %s251, 31
        %s254 = smul.addr %s253, 8
        %s255 = scalar_lea.vmem %s1, %s254
        %p256 = pneg %p83
        %p257 = pneg %p80
        %s258 = sand.u32 %s98, 1
        %s259 = scalar_lea.sflag [#allocation4], %s258
        %s260 = sand.u32 %s98, 1
        %s261 = smul.addr %s260, 128
        %s262 = scalar_lea.vmem [#allocation3], %s261
        %p263 = pneg %p111
        %p264 = pneg %p108
        %s265 = smul.u32 16, %s29
        %p266 = scmp.lt.s32.totalorder %s265, 31
        %s267 = scalar_select %p266, %s265, 31
        %p268 = scmp.lt.s32.totalorder %s28, 0
        %s269 = scalar_select %p268, %s28, 0
        %s270 = sadd.s32 %s269, %s267
        %s271 = smul.addr %s270, 8
        %s272 = scalar_lea.vmem %s3, %s271
        %p273 = pneg %p139
        %p274 = pneg %p136
        %p275 = pneg %p167
        %p276 = pneg %p164
        %s277 = sand.u32 %s154, 1
        %s278 = scalar_lea.sflag [#allocation5], %s277
        %s279 = sand.u32 %s154, 1
        %s280 = smul.addr %s279, 128
        %s281 = scalar_lea.vmem [#allocation6], %s280
        %s282 = smul.u32 16, %s27
        %p283 = scmp.lt.s32.totalorder %s282, 31
        %s284 = scalar_select %p283, %s282, 31
        %s285 = smul.addr %s284, 8
        %s286 = scalar_lea.vmem %s1, %s285
        %s287 = smul.u32 16, %s27
        %s288 = smul.u32 16, %s27
        %s289 = smul.u32 16, %s29
        %p290 = scmp.lt.s32.totalorder %s289, 31
        %s291 = scalar_select %p290, %s289, 31
        %p292 = scmp.lt.s32.totalorder %s28, 0
        %s293 = scalar_select %p292, %s28, 0
        %s294 = sadd.s32 %s293, %s291
        %s295 = smul.addr %s294, 8
        %s296 = scalar_lea.vmem %s3, %s295
        %s297 = smul.u32 16, %s29
        %s298 = smul.u32 16, %s27
        %p299 = scmp.eq.s32.totalorder %s29, 0
        // Predicated region
        $region41: #{tpu_custom_call.1} parent=35 // pred_check
          %p300 = pneg %p299
        $region42: #{tpu_custom_call.1} parent=35 // pred_check_branch
          %302 = sbr.rel (%p300) target = $region44
        $region43: #{tpu_custom_call.1} parent=35 // pred_region
          %303 = vst [vmem:[%s281] sm:$0xff] 0.0
          %304 = vst [vmem:[%s281 + $0x8] sm:$0xff] 0.0
          %305 = vst [vmem:[%s281 + $0x10] sm:$0xff] 0.0
          %306 = vst [vmem:[%s281 + $0x18] sm:$0xff] 0.0
          %307 = vst [vmem:[%s281 + $0x20] sm:$0xff] 0.0
          %308 = vst [vmem:[%s281 + $0x28] sm:$0xff] 0.0
          %309 = vst [vmem:[%s281 + $0x30] sm:$0xff] 0.0
          %310 = vst [vmem:[%s281 + $0x38] sm:$0xff] 0.0
          %311 = vst [vmem:[%s281 + $0x40] sm:$0xff] 0.0
          %312 = vst [vmem:[%s281 + $0x48] sm:$0xff] 0.0
          %313 = vst [vmem:[%s281 + $0x50] sm:$0xff] 0.0
          %314 = vst [vmem:[%s281 + $0x58] sm:$0xff] 0.0
          %315 = vst [vmem:[%s281 + $0x60] sm:$0xff] 0.0
          %316 = vst [vmem:[%s281 + $0x68] sm:$0xff] 0.0
          %317 = vst [vmem:[%s281 + $0x70] sm:$0xff] 0.0
          %318 = vst [vmem:[%s281 + $0x78] sm:$0xff] 0.0
        $region44: #{tpu_custom_call.1} parent=35 // pred_fallthru
          _
        %v319 = vld [vmem:[%s281] sm:$0xff]
        %v320 = vld [vmem:[%s281 + $0x8] sm:$0xff]
        %v321 = vld [vmem:[%s281 + $0x10] sm:$0xff]
        %v322 = vld [vmem:[%s281 + $0x18] sm:$0xff]
        %v323 = vld [vmem:[%s281 + $0x20] sm:$0xff]
        %v324 = vld [vmem:[%s281 + $0x28] sm:$0xff]
        %v325 = vld [vmem:[%s281 + $0x30] sm:$0xff]
        %v326 = vld [vmem:[%s281 + $0x38] sm:$0xff]
        %v327 = vld [vmem:[%s281 + $0x40] sm:$0xff]
        %v328 = vld [vmem:[%s281 + $0x48] sm:$0xff]
        %v329 = vld [vmem:[%s281 + $0x50] sm:$0xff]
        %v330 = vld [vmem:[%s281 + $0x58] sm:$0xff]
        %v331 = vld [vmem:[%s281 + $0x60] sm:$0xff]
        %v332 = vld [vmem:[%s281 + $0x68] sm:$0xff]
        %v333 = vld [vmem:[%s281 + $0x70] sm:$0xff]
        %v334 = vld [vmem:[%s281 + $0x78] sm:$0xff]
        %v335 = vld [vmem:[%s244] sm:$0xff]
        %v336 = vld [vmem:[%s244 + $0x8] sm:$0xff]
        %v337 = vld [vmem:[%s244 + $0x10] sm:$0xff]
        %v338 = vld [vmem:[%s244 + $0x18] sm:$0xff]
        %v339 = vld [vmem:[%s244 + $0x20] sm:$0xff]
        %v340 = vld [vmem:[%s244 + $0x28] sm:$0xff]
        %v341 = vld [vmem:[%s244 + $0x30] sm:$0xff]
        %v342 = vld [vmem:[%s244 + $0x38] sm:$0xff]
        %v343 = vld [vmem:[%s244 + $0x40] sm:$0xff]
        %v344 = vld [vmem:[%s244 + $0x48] sm:$0xff]
        %v345 = vld [vmem:[%s244 + $0x50] sm:$0xff]
        %v346 = vld [vmem:[%s244 + $0x58] sm:$0xff]
        %v347 = vld [vmem:[%s244 + $0x60] sm:$0xff]
        %v348 = vld [vmem:[%s244 + $0x68] sm:$0xff]
        %v349 = vld [vmem:[%s244 + $0x70] sm:$0xff]
        %v350 = vld [vmem:[%s244 + $0x78] sm:$0xff]
        %v351 = vld [vmem:[%s296] sm:$0xff]
        %v352 = vld [vmem:[%s296 + $0x8] sm:$0xff]
        %v353 = vld [vmem:[%s296 + $0x10] sm:$0xff]
        %v354 = vld [vmem:[%s296 + $0x18] sm:$0xff]
        %v355 = vld [vmem:[%s296 + $0x20] sm:$0xff]
        %v356 = vld [vmem:[%s296 + $0x28] sm:$0xff]
        %v357 = vld [vmem:[%s296 + $0x30] sm:$0xff]
        %v358 = vld [vmem:[%s296 + $0x38] sm:$0xff]
        %v359 = vld [vmem:[%s296 + $0x40] sm:$0xff]
        %v360 = vld [vmem:[%s296 + $0x48] sm:$0xff]
        %v361 = vld [vmem:[%s296 + $0x50] sm:$0xff]
        %v362 = vld [vmem:[%s296 + $0x58] sm:$0xff]
        %v363 = vld [vmem:[%s296 + $0x60] sm:$0xff]
        %v364 = vld [vmem:[%s296 + $0x68] sm:$0xff]
        %v365 = vld [vmem:[%s296 + $0x70] sm:$0xff]
        %v366 = vld [vmem:[%s296 + $0x78] sm:$0xff]
        %367 = vmatprep.subr.mxu0 0.0
        %368 = vmatpush1.msra.mxu0 %v366
        %369 = vmatprep.subr.mxu0 0.0
        %370 = vmatpush1.msra.mxu0 %v365
        %371 = vmatprep.subr.mxu0 0.0
        %372 = vmatpush1.msra.mxu0 %v364
        %373 = vmatprep.subr.mxu0 0.0
        %374 = vmatpush1.msra.mxu0 %v363
        %375 = vmatprep.subr.mxu0 0.0
        %376 = vmatpush1.msra.mxu0 %v362
        %377 = vmatprep.subr.mxu0 0.0
        %378 = vmatpush1.msra.mxu0 %v361
        %379 = vmatprep.subr.mxu0 0.0
        %380 = vmatpush1.msra.mxu0 %v360
        %381 = vmatprep.subr.mxu0 0.0
        %382 = vmatpush1.msra.mxu0 %v359
        %383 = vmatprep.subr.mxu0 0.0
        %384 = vmatpush1.msra.mxu0 %v358
        %385 = vmatprep.subr.mxu0 0.0
        %386 = vmatpush1.msra.mxu0 %v357
        %387 = vmatprep.subr.mxu0 0.0
        %388 = vmatpush1.msra.mxu0 %v356
        %389 = vmatprep.subr.mxu0 0.0
        %390 = vmatpush1.msra.mxu0 %v355
        %391 = vmatprep.subr.mxu0 0.0
        %392 = vmatpush1.msra.mxu0 %v354
        %393 = vmatprep.subr.mxu0 0.0
        %394 = vmatpush1.msra.mxu0 %v353
        %395 = vmatprep.subr.mxu0 0.0
        %396 = vmatpush1.msra.mxu0 %v352
        %397 = vmatprep.subr.mxu0 0.0
        %398 = vmatpush1.msra.mxu0 %v351
        %399 = vmatprep.subr.mxu0 0.0
        %400 = vmatpush2.msra.mxu0 0.0
        %401 = vmatprep.subr.mxu0 0.0
        %402 = vmatpush2.msra.mxu0 0.0
        %403 = vmatprep.subr.mxu0 0.0
        %404 = vmatpush2.msra.mxu0 0.0
        %405 = vmatprep.subr.mxu0 0.0
        %406 = vmatpush2.msra.mxu0 0.0
        %407 = vmatprep.subr.mxu0 0.0
        %408 = vmatpush2.msra.mxu0 0.0
        %409 = vmatprep.subr.mxu0 0.0
        %410 = vmatpush2.msra.mxu0 0.0
        %411 = vmatprep.subr.mxu0 0.0
        %412 = vmatpush2.msra.mxu0 0.0
        %413 = vmatprep.subr.mxu0 0.0
        %414 = vmatpush2.msra.mxu0 0.0
        %415 = vmatprep.subr.mxu0 0.0
        %416 = vmatpush2.msra.mxu0 0.0
        %417 = vmatprep.subr.mxu0 0.0
        %418 = vmatpush2.msra.mxu0 0.0
        %419 = vmatprep.subr.mxu0 0.0
        %420 = vmatpush2.msra.mxu0 0.0
        %421 = vmatprep.subr.mxu0 0.0
        %422 = vmatpush2.msra.mxu0 0.0
        %423 = vmatprep.subr.mxu0 0.0
        %424 = vmatpush2.msra.mxu0 0.0
        %425 = vmatprep.subr.mxu0 0.0
        %426 = vmatpush2.msra.mxu0 0.0
        %427 = vmatprep.subr.mxu0 0.0
        %428 = vmatpush2.msra.mxu0 0.0
        %429 = vmatprep.subr.mxu0 0.0
        %430 = vmatpush2.msra.mxu0 0.0
        %431 = vmatprep.mubr.f32.mxu0 0.0
        %432 = vmatmul.mubr.f32.gmra.mxu0 %v335
        %v433 = vpop.f32.mrf.mxu0
        %v434 = vadd.f32 0.0, %v433
        %v435 = vpop.f32.mrf.mxu0
        %436 = vmatprep.mubr.f32.mxu0 0.0
        %437 = vmatmul.mubr.f32.gmra.mxu0 %v336
        %v438 = vpop.f32.mrf.mxu0
        %v439 = vadd.f32 0.0, %v438
        %v440 = vpop.f32.mrf.mxu0
        %441 = vmatprep.mubr.f32.mxu0 0.0
        %442 = vmatmul.mubr.f32.gmra.mxu0 %v337
        %v443 = vpop.f32.mrf.mxu0
        %v444 = vadd.f32 0.0, %v443
        %v445 = vpop.f32.mrf.mxu0
        %446 = vmatprep.mubr.f32.mxu0 0.0
        %447 = vmatmul.mubr.f32.gmra.mxu0 %v338
        %v448 = vpop.f32.mrf.mxu0
        %v449 = vadd.f32 0.0, %v448
        %v450 = vpop.f32.mrf.mxu0
        %451 = vmatprep.mubr.f32.mxu0 0.0
        %452 = vmatmul.mubr.f32.gmra.mxu0 %v339
        %v453 = vpop.f32.mrf.mxu0
        %v454 = vadd.f32 0.0, %v453
        %v455 = vpop.f32.mrf.mxu0
        %456 = vmatprep.mubr.f32.mxu0 0.0
        %457 = vmatmul.mubr.f32.gmra.mxu0 %v340
        %v458 = vpop.f32.mrf.mxu0
        %v459 = vadd.f32 0.0, %v458
        %v460 = vpop.f32.mrf.mxu0
        %461 = vmatprep.mubr.f32.mxu0 0.0
        %462 = vmatmul.mubr.f32.gmra.mxu0 %v341
        %v463 = vpop.f32.mrf.mxu0
        %v464 = vadd.f32 0.0, %v463
        %v465 = vpop.f32.mrf.mxu0
        %466 = vmatprep.mubr.f32.mxu0 0.0
        %467 = vmatmul.mubr.f32.gmra.mxu0 %v342
        %v468 = vpop.f32.mrf.mxu0
        %v469 = vadd.f32 0.0, %v468
        %v470 = vpop.f32.mrf.mxu0
        %471 = vmatprep.mubr.f32.mxu0 0.0
        %472 = vmatmul.mubr.f32.gmra.mxu0 %v343
        %v473 = vpop.f32.mrf.mxu0
        %v474 = vadd.f32 0.0, %v473
        %v475 = vpop.f32.mrf.mxu0
        %476 = vmatprep.mubr.f32.mxu0 0.0
        %477 = vmatmul.mubr.f32.gmra.mxu0 %v344
        %v478 = vpop.f32.mrf.mxu0
        %v479 = vadd.f32 0.0, %v478
        %v480 = vpop.f32.mrf.mxu0
        %481 = vmatprep.mubr.f32.mxu0 0.0
        %482 = vmatmul.mubr.f32.gmra.mxu0 %v345
        %v483 = vpop.f32.mrf.mxu0
        %v484 = vadd.f32 0.0, %v483
        %v485 = vpop.f32.mrf.mxu0
        %486 = vmatprep.mubr.f32.mxu0 0.0
        %487 = vmatmul.mubr.f32.gmra.mxu0 %v346
        %v488 = vpop.f32.mrf.mxu0
        %v489 = vadd.f32 0.0, %v488
        %v490 = vpop.f32.mrf.mxu0
        %491 = vmatprep.mubr.f32.mxu0 0.0
        %492 = vmatmul.mubr.f32.gmra.mxu0 %v347
        %v493 = vpop.f32.mrf.mxu0
        %v494 = vadd.f32 0.0, %v493
        %v495 = vpop.f32.mrf.mxu0
        %496 = vmatprep.mubr.f32.mxu0 0.0
        %497 = vmatmul.mubr.f32.gmra.mxu0 %v348
        %v498 = vpop.f32.mrf.mxu0
        %v499 = vadd.f32 0.0, %v498
        %v500 = vpop.f32.mrf.mxu0
        %501 = vmatprep.mubr.f32.mxu0 0.0
        %502 = vmatmul.mubr.f32.gmra.mxu0 %v349
        %v503 = vpop.f32.mrf.mxu0
        %v504 = vadd.f32 0.0, %v503
        %v505 = vpop.f32.mrf.mxu0
        %506 = vmatprep.mubr.f32.mxu0 0.0
        %507 = vmatmul.mubr.f32.gmra.mxu0 %v350
        %v508 = vpop.f32.mrf.mxu0
        %v509 = vadd.f32 0.0, %v508
        %v510 = vpop.f32.mrf.mxu0
        %511 = vdwg.mxu0
        %v512 = vadd.f32 %v319, %v434
        %v513 = vadd.f32 %v320, %v439
        %v514 = vadd.f32 %v321, %v444
        %v515 = vadd.f32 %v322, %v449
        %v516 = vadd.f32 %v323, %v454
        %v517 = vadd.f32 %v324, %v459
        %v518 = vadd.f32 %v325, %v464
        %v519 = vadd.f32 %v326, %v469
        %v520 = vadd.f32 %v327, %v474
        %v521 = vadd.f32 %v328, %v479
        %v522 = vadd.f32 %v329, %v484
        %v523 = vadd.f32 %v330, %v489
        %v524 = vadd.f32 %v331, %v494
        %v525 = vadd.f32 %v332, %v499
        %v526 = vadd.f32 %v333, %v504
        %v527 = vadd.f32 %v334, %v509
        %528 = vst [vmem:[%s281] sm:$0xff] %v512
        %529 = vst [vmem:[%s281 + $0x8] sm:$0xff] %v513
        %530 = vst [vmem:[%s281 + $0x10] sm:$0xff] %v514
        %531 = vst [vmem:[%s281 + $0x18] sm:$0xff] %v515
        %532 = vst [vmem:[%s281 + $0x20] sm:$0xff] %v516
        %533 = vst [vmem:[%s281 + $0x28] sm:$0xff] %v517
        %534 = vst [vmem:[%s281 + $0x30] sm:$0xff] %v518
        %535 = vst [vmem:[%s281 + $0x38] sm:$0xff] %v519
        %536 = vst [vmem:[%s281 + $0x40] sm:$0xff] %v520
        %537 = vst [vmem:[%s281 + $0x48] sm:$0xff] %v521
        %538 = vst [vmem:[%s281 + $0x50] sm:$0xff] %v522
        %539 = vst [vmem:[%s281 + $0x58] sm:$0xff] %v523
        %540 = vst [vmem:[%s281 + $0x60] sm:$0xff] %v524
        %541 = vst [vmem:[%s281 + $0x68] sm:$0xff] %v525
        %542 = vst [vmem:[%s281 + $0x70] sm:$0xff] %v526
        %543 = vst [vmem:[%s281 + $0x78] sm:$0xff] %v527
        %p544 = scmp.eq.s32.totalorder %s27, %s29
        // Predicated region
        $region45: #{tpu_custom_call.1} parent=35 // pred_check
          %p545 = pneg %p544
        $region46: #{tpu_custom_call.1} parent=35 // pred_check_branch
          %547 = sbr.rel (%p545) target = $region48
        $region47: #{tpu_custom_call.1} parent=35 // pred_region
          %v548 = vld [vmem:[%s281] sm:$0xff]
          %v549 = vld [vmem:[%s281 + $0x8] sm:$0xff]
          %v550 = vld [vmem:[%s281 + $0x10] sm:$0xff]
          %v551 = vld [vmem:[%s281 + $0x18] sm:$0xff]
          %v552 = vld [vmem:[%s281 + $0x20] sm:$0xff]
          %v553 = vld [vmem:[%s281 + $0x28] sm:$0xff]
          %v554 = vld [vmem:[%s281 + $0x30] sm:$0xff]
          %v555 = vld [vmem:[%s281 + $0x38] sm:$0xff]
          %v556 = vld [vmem:[%s281 + $0x40] sm:$0xff]
          %v557 = vld [vmem:[%s281 + $0x48] sm:$0xff]
          %v558 = vld [vmem:[%s281 + $0x50] sm:$0xff]
          %v559 = vld [vmem:[%s281 + $0x58] sm:$0xff]
          %v560 = vld [vmem:[%s281 + $0x60] sm:$0xff]
          %v561 = vld [vmem:[%s281 + $0x68] sm:$0xff]
          %v562 = vld [vmem:[%s281 + $0x70] sm:$0xff]
          %v563 = vld [vmem:[%s281 + $0x78] sm:$0xff]
          %s564 = sld [smem:[#allocation2]]
          %v565 = vld [vmem:[%s286] sm:$0xff]
          %v566 = vld [vmem:[%s286 + $0x8] sm:$0xff]
          %v567 = vld [vmem:[%s286 + $0x10] sm:$0xff]
          %v568 = vld [vmem:[%s286 + $0x18] sm:$0xff]
          %v569 = vld [vmem:[%s286 + $0x20] sm:$0xff]
          %v570 = vld [vmem:[%s286 + $0x28] sm:$0xff]
          %v571 = vld [vmem:[%s286 + $0x30] sm:$0xff]
          %v572 = vld [vmem:[%s286 + $0x38] sm:$0xff]
          %v573 = vld [vmem:[%s286 + $0x40] sm:$0xff]
          %v574 = vld [vmem:[%s286 + $0x48] sm:$0xff]
          %v575 = vld [vmem:[%s286 + $0x50] sm:$0xff]
          %v576 = vld [vmem:[%s286 + $0x58] sm:$0xff]
          %v577 = vld [vmem:[%s286 + $0x60] sm:$0xff]
          %v578 = vld [vmem:[%s286 + $0x68] sm:$0xff]
          %v579 = vld [vmem:[%s286 + $0x70] sm:$0xff]
          %v580 = vld [vmem:[%s286 + $0x78] sm:$0xff]
          %v581 = vstv %s564
          %v582 = vmul.f32 %v581, %v565
          %v583 = vmul.f32 %v581, %v566
          %v584 = vmul.f32 %v581, %v567
          %v585 = vmul.f32 %v581, %v568
          %v586 = vmul.f32 %v581, %v569
          %v587 = vmul.f32 %v581, %v570
          %v588 = vmul.f32 %v581, %v571
          %v589 = vmul.f32 %v581, %v572
          %v590 = vmul.f32 %v581, %v573
          %v591 = vmul.f32 %v581, %v574
          %v592 = vmul.f32 %v581, %v575
          %v593 = vmul.f32 %v581, %v576
          %v594 = vmul.f32 %v581, %v577
          %v595 = vmul.f32 %v581, %v578
          %v596 = vmul.f32 %v581, %v579
          %v597 = vmul.f32 %v581, %v580
          %v598 = vld [vmem:[%s296] sm:$0xff]
          %v599 = vld [vmem:[%s296 + $0x8] sm:$0xff]
          %v600 = vld [vmem:[%s296 + $0x10] sm:$0xff]
          %v601 = vld [vmem:[%s296 + $0x18] sm:$0xff]
          %v602 = vld [vmem:[%s296 + $0x20] sm:$0xff]
          %v603 = vld [vmem:[%s296 + $0x28] sm:$0xff]
          %v604 = vld [vmem:[%s296 + $0x30] sm:$0xff]
          %v605 = vld [vmem:[%s296 + $0x38] sm:$0xff]
          %v606 = vld [vmem:[%s296 + $0x40] sm:$0xff]
          %v607 = vld [vmem:[%s296 + $0x48] sm:$0xff]
          %v608 = vld [vmem:[%s296 + $0x50] sm:$0xff]
          %v609 = vld [vmem:[%s296 + $0x58] sm:$0xff]
          %v610 = vld [vmem:[%s296 + $0x60] sm:$0xff]
          %v611 = vld [vmem:[%s296 + $0x68] sm:$0xff]
          %v612 = vld [vmem:[%s296 + $0x70] sm:$0xff]
          %v613 = vld [vmem:[%s296 + $0x78] sm:$0xff]
          %615 = vset.pattern.permute.xlu0 0
          %616 = vperm.xlu0 %615, %v582
          %v617 = vpop.permute.xlu0 %616
          %620 = vset.pattern.permute.xlu0 0
          %621 = vperm.xlu0 %620, %v583
          %v622 = vpop.permute.xlu0 %621
          %625 = vset.pattern.permute.xlu0 0
          %626 = vperm.xlu0 %625, %v584
          %v627 = vpop.permute.xlu0 %626
          %630 = vset.pattern.permute.xlu0 0
          %631 = vperm.xlu0 %630, %v585
          %v632 = vpop.permute.xlu0 %631
          %635 = vset.pattern.permute.xlu0 0
          %636 = vperm.xlu0 %635, %v586
          %v637 = vpop.permute.xlu0 %636
          %640 = vset.pattern.permute.xlu0 0
          %641 = vperm.xlu0 %640, %v587
          %v642 = vpop.permute.xlu0 %641
          %645 = vset.pattern.permute.xlu0 0
          %646 = vperm.xlu0 %645, %v588
          %v647 = vpop.permute.xlu0 %646
          %650 = vset.pattern.permute.xlu0 0
          %651 = vperm.xlu0 %650, %v589
          %v652 = vpop.permute.xlu0 %651
          %655 = vset.pattern.permute.xlu0 0
          %656 = vperm.xlu0 %655, %v590
          %v657 = vpop.permute.xlu0 %656
          %660 = vset.pattern.permute.xlu0 0
          %661 = vperm.xlu0 %660, %v591
          %v662 = vpop.permute.xlu0 %661
          %665 = vset.pattern.permute.xlu0 0
          %666 = vperm.xlu0 %665, %v592
          %v667 = vpop.permute.xlu0 %666
          %670 = vset.pattern.permute.xlu0 0
          %671 = vperm.xlu0 %670, %v593
          %v672 = vpop.permute.xlu0 %671
          %675 = vset.pattern.permute.xlu0 0
          %676 = vperm.xlu0 %675, %v594
          %v677 = vpop.permute.xlu0 %676
          %680 = vset.pattern.permute.xlu0 0
          %681 = vperm.xlu0 %680, %v595
          %v682 = vpop.permute.xlu0 %681
          %685 = vset.pattern.permute.xlu0 0
          %686 = vperm.xlu0 %685, %v596
          %v687 = vpop.permute.xlu0 %686
          %690 = vset.pattern.permute.xlu0 0
          %691 = vperm.xlu0 %690, %v597
          %v692 = vpop.permute.xlu0 %691
          %v694 = vmul.f32 %v617, %v598
          %v695 = vmul.f32 %v622, %v599
          %v696 = vmul.f32 %v627, %v600
          %v697 = vmul.f32 %v632, %v601
          %v698 = vmul.f32 %v637, %v602
          %v699 = vmul.f32 %v642, %v603
          %v700 = vmul.f32 %v647, %v604
          %v701 = vmul.f32 %v652, %v605
          %v702 = vmul.f32 %v657, %v606
          %v703 = vmul.f32 %v662, %v607
          %v704 = vmul.f32 %v667, %v608
          %v705 = vmul.f32 %v672, %v609
          %v706 = vmul.f32 %v677, %v610
          %v707 = vmul.f32 %v682, %v611
          %v708 = vmul.f32 %v687, %v612
          %v709 = vmul.f32 %v692, %v613
          %v710 = vadd.f32 %v548, %v694
          %v711 = vadd.f32 %v549, %v695
          %v712 = vadd.f32 %v550, %v696
          %v713 = vadd.f32 %v551, %v697
          %v714 = vadd.f32 %v552, %v698
          %v715 = vadd.f32 %v553, %v699
          %v716 = vadd.f32 %v554, %v700
          %v717 = vadd.f32 %v555, %v701
          %v718 = vadd.f32 %v556, %v702
          %v719 = vadd.f32 %v557, %v703
          %v720 = vadd.f32 %v558, %v704
          %v721 = vadd.f32 %v559, %v705
          %v722 = vadd.f32 %v560, %v706
          %v723 = vadd.f32 %v561, %v707
          %v724 = vadd.f32 %v562, %v708
          %v725 = vadd.f32 %v563, %v709
          %726 = vst [vmem:[%s281] sm:$0xff] %v710
          %727 = vst [vmem:[%s281 + $0x8] sm:$0xff] %v711
          %728 = vst [vmem:[%s281 + $0x10] sm:$0xff] %v712
          %729 = vst [vmem:[%s281 + $0x18] sm:$0xff] %v713
          %730 = vst [vmem:[%s281 + $0x20] sm:$0xff] %v714
          %731 = vst [vmem:[%s281 + $0x28] sm:$0xff] %v715
          %732 = vst [vmem:[%s281 + $0x30] sm:$0xff] %v716
          %733 = vst [vmem:[%s281 + $0x38] sm:$0xff] %v717
          %734 = vst [vmem:[%s281 + $0x40] sm:$0xff] %v718
          %735 = vst [vmem:[%s281 + $0x48] sm:$0xff] %v719
          %736 = vst [vmem:[%s281 + $0x50] sm:$0xff] %v720
          %737 = vst [vmem:[%s281 + $0x58] sm:$0xff] %v721
          %738 = vst [vmem:[%s281 + $0x60] sm:$0xff] %v722
          %739 = vst [vmem:[%s281 + $0x68] sm:$0xff] %v723
          %740 = vst [vmem:[%s281 + $0x70] sm:$0xff] %v724
          %741 = vst [vmem:[%s281 + $0x78] sm:$0xff] %v725
        $region48: #{tpu_custom_call.1} parent=35 // pred_fallthru
          _
        %s742 = sand.u32 %s154, 1
        %s743 = scalar_lea.sflag [#allocation5], %s742
        %s744 = sand.u32 %s154, 1
        %s745 = smul.addr %s744, 128
        %s746 = scalar_lea.vmem [#allocation6], %s745
        // Predicated region
        $region49: #{tpu_custom_call.1} parent=35 // pred_check
          %p747 = pneg %p164
        $region50: #{tpu_custom_call.1} parent=35 // pred_check_branch
          %749 = sbr.rel (%p747) target = $region52
        $region51: #{tpu_custom_call.1} parent=35 // pred_region
          %s750 = smul.u32 16, %s27
          %s752 = ssub.s32 2048, 2048
          %753 = vsyncadd %s743, %s752
          %s754 = sadd.s32 %s28, %s750
          %s755 = smul.addr %s754, 128
          %s756 = scalar_lea.hbm %s4, %s755
          %s757 = sshll.u32 %s746, 4
          %s758 = int_to_ptr.vmem [resolvable:$true] %s757
          %763 = dma.vmem_to_hbm [thread:$0]  %s758, 2048, %s756, %s743, 128, 128, 8
        $region52: #{tpu_custom_call.1} parent=35 // pred_fallthru
          _
      $region36: #{tpu_custom_call.1} parent=5 // pred_fallthru
        _
      %p764 = scmp.le.s32.totalorder 2, %s17
      // Predicated region
      $region53: #{tpu_custom_call.1} parent=5 // pred_check
        %p765 = pneg %p764
      $region54: #{tpu_custom_call.1} parent=5 // pred_check_branch
        %767 = sbr.rel (%p765) target = $region56
      $region55: #{tpu_custom_call.1} parent=5 // pred_region
        %s768 = ssub.s32 %s17, 2
        // Predicated region
        $region57: #{tpu_custom_call.1} parent=55 // pred_check
          %p769 = pneg %p170
        $region58: #{tpu_custom_call.1} parent=55 // pred_check_branch
          %771 = sbr.rel (%p769) target = $region60
        $region59: #{tpu_custom_call.1} parent=55 // pred_region
          %s772 = sand.u32 %s155, 1
          %s773 = scalar_lea.sflag [#allocation5], %s772
          %s774 = sand.u32 %s155, 1
          %s775 = smul.addr %s774, 128
          %s776 = scalar_lea.vmem [#allocation6], %s775
          %777 = dma.done %s773, 2048
        $region60: #{tpu_custom_call.1} parent=55 // pred_fallthru
          _
      $region56: #{tpu_custom_call.1} parent=5 // pred_fallthru
        _
    $region6: #{tpu_custom_call.1} parent=1 // loop_footer
      %s21 = sadd.s32 1, %s17
    $region7: #{tpu_custom_call.1} parent=1 // loop_footer_branch
      %16 = sbr.rel target = $region3
    $region8: #{tpu_custom_call.1} parent=1 // loop_exit
      _
    %778 = vsyncpa [#allocation4], 1
    %s779 = scalar_lea.sflag [#allocation4], 1
    %780 = vsyncpa %s779, 1
    %781 = vsyncpa [#allocation5], 1
    %s782 = scalar_lea.sflag [#allocation5], 1
    %783 = vsyncpa %s782, 1

</llo_original>
